<compile_context>
chip_gen: v7x
topology: tpu7x:2x2x1
jax: 0.10.0
libtpu: 0.0.40
codegen_flags: <defaults>
</compile_context>

<pallas_src>
import jax
import jax.numpy as jnp
from jax.experimental import pallas as pl
from jax.experimental.pallas import tpu as pltpu


def carla_wrap_kernel(x_ref, w1_ref, b1_ref, w2p_ref, b2p_ref, out_ref):
    # Hidden layer: (TM, F) @ (F, H) on the MXU, f32 accumulation, then
    # bias + ReLU on the VPU.
    h = jnp.dot(x_ref[...], w1_ref[...], preferred_element_type=jnp.float32)
    h = jnp.maximum(h + b1_ref[...], 0.0)

    # Packed output layer: columns of w2p are [-w2, +w2], so this single small
    # pass produces both logits; sigmoid of [-z, z] is exactly [1-p, p].
    z = jnp.dot(h, w2p_ref[...], preferred_element_type=jnp.float32)
    z = z + b2p_ref[...]

    # sigmoid(z) = 1 / (1 + exp(-z)); exp and the approximate reciprocal both
    # run on the EUP slot, keeping the store-side epilogue off the VALU.
    out_ref[...] = pl.reciprocal(1.0 + jnp.exp(-z), approx=True)


def _round_up(n, m):
    return ((n + m - 1) // m) * m


def carla_wrap_forward(x, w1, b1, w2, b2, *, tm=1024, compute_dtype=jnp.float32):
    """CarlaWrap.forward: out[:, 1] = ann_clf(x).squeeze(); out[:, 0] = 1 - out[:, 1]."""
    B, F = x.shape
    H = w1.shape[1]

    # Pre-pack the second layer so the kernel emits [1-p, p] from one pass.
    w2p = jnp.concatenate([-w2, w2], axis=1).astype(jnp.float32)   # (H, 2)
    b2p = jnp.concatenate([-b2, b2], axis=1).astype(jnp.float32)   # (1, 2)

    # bf16 stream for x/w1 (v6e/v7x): halves HBM traffic; accumulation stays f32.
    x = x.astype(compute_dtype)
    w1 = w1.astype(compute_dtype)
    b1 = b1.astype(jnp.float32)

    # Batch tile: multiple of 8 (sublane); large (>=512-1024) for real batches
    # to amortize the ~0.35us/step overhead, clamped for tiny inputs.
    tm = max(8, min(tm, _round_up(B, 8)))
    b_pad = _round_up(B, tm)
    if b_pad != B:
        # Tail tile handling: pad rows (results are sliced off below).
        x = jnp.pad(x, ((0, b_pad - B), (0, 0)))
    grid = (b_pad // tm,)

    const = lambda shape: pl.BlockSpec(shape, lambda i, s=shape: (0,) * len(s))
    out = pl.pallas_call(
        carla_wrap_kernel,
        out_shape=jax.ShapeDtypeStruct((b_pad, 2), jnp.float32),
        grid=grid,
        in_specs=[
            pl.BlockSpec((tm, F), lambda i: (i, 0)),   # x: streamed per batch tile
            const((F, H)),                             # weights: VMEM-resident
            const((1, H)),
            const((H, 2)),
            const((1, 2)),
        ],
        out_specs=pl.BlockSpec((tm, 2), lambda i: (i, 0)),
        compiler_params=pltpu.CompilerParams(
            # Batch tiles are independent -> megacore split on v7x.
            dimension_semantics=("parallel",),
        ),
    )(x, w1, b1, w2p, b2p)
    return out[:B]


if __name__ == "__main__":
    # Small tabular shapes; B chosen so the padded batch (48) spans several
    # grid steps with tm=16 and exercises tail padding.
    B, F, H = 40, 32, 32

    key = jax.random.PRNGKey(0)
    kx, kw1, kb1, kw2, kb2 = jax.random.split(key, 5)

    x = jax.random.normal(kx, (B, F), dtype=jnp.float32)
    # TODO(synk): `ann_clf` is not specified in bridge.py; deterministic
    # synthetic 1-hidden-layer classifier parameters stand in for it.
    w1 = jax.random.normal(kw1, (F, H), dtype=jnp.float32) * 0.1
    b1 = jax.random.normal(kb1, (1, H), dtype=jnp.float32) * 0.1
    w2 = jax.random.normal(kw2, (H, 1), dtype=jnp.float32) * 0.1
    b2 = jax.random.normal(kb2, (1, 1), dtype=jnp.float32) * 0.1

    # Pure-JAX reference of CarlaWrap.forward.
    p_ref = jax.nn.sigmoid(jnp.maximum(x @ w1 + b1, 0.0) @ w2 + b2)   # (B, 1)
    ref = jnp.concatenate([1.0 - p_ref, p_ref], axis=1)               # (B, 2)

    # f32 path (tight check), multi-step grid.
    out_f32 = jax.block_until_ready(
        carla_wrap_forward(x, w1, b1, w2, b2, tm=16, compute_dtype=jnp.float32))
    assert out_f32.shape == (B, 2)
    assert jnp.allclose(out_f32, ref, atol=5e-3, rtol=0.0), float(
        jnp.max(jnp.abs(out_f32 - ref)))

    # bf16 x/w1 stream (v6e/v7x-style), looser tolerance.
    out_bf16 = jax.block_until_ready(
        carla_wrap_forward(x, w1, b1, w2, b2, tm=16, compute_dtype=jnp.bfloat16))
    assert out_bf16.shape == (B, 2)
    assert jnp.allclose(out_bf16, ref, atol=3e-2, rtol=0.0), float(
        jnp.max(jnp.abs(out_bf16 - ref)))

    print("KERNEL_OK")
</pallas_src>

<mosaic_0001>
module attributes {stable_mosaic.version = 11 : i64} {
  func.func @carla_wrap_kernel(%arg0: i32, %arg1: memref<16x32xf32, #tpu.memory_space<vmem>>, %arg2: memref<32x32xf32, #tpu.memory_space<vmem>>, %arg3: memref<1x32xf32, #tpu.memory_space<vmem>>, %arg4: memref<32x2xf32, #tpu.memory_space<vmem>>, %arg5: memref<1x2xf32, #tpu.memory_space<vmem>>, %arg6: memref<16x2xf32, #tpu.memory_space<vmem>>) attributes {dimension_semantics = [#tpu.dimension_semantics<parallel>], iteration_bounds = array<i64: 3>, scalar_prefetch = 0 : i64, scratch_operands = 0 : i64, tpu.core_type = #tpu.core_type<tc>, window_params = [{transform_indices = @transform_0, window_bounds = array<i64: 16, 32>}, {pipeline_mode = #tpu.pipeline_mode<synchronous>, transform_indices = @transform_1, window_bounds = array<i64: 32, 32>}, {pipeline_mode = #tpu.pipeline_mode<synchronous>, transform_indices = @transform_2, window_bounds = array<i64: 1, 32>}, {pipeline_mode = #tpu.pipeline_mode<synchronous>, transform_indices = @transform_3, window_bounds = array<i64: 32, 2>}, {pipeline_mode = #tpu.pipeline_mode<synchronous>, transform_indices = @transform_4, window_bounds = array<i64: 1, 2>}, {transform_indices = @transform_5, window_bounds = array<i64: 16, 2>}]} {
    %c0 = arith.constant 0 : index
    %c0_0 = arith.constant 0 : index
    %0 = vector.load %arg1[%c0, %c0_0] : memref<16x32xf32, #tpu.memory_space<vmem>>, vector<16x32xf32>
    %c0_1 = arith.constant 0 : index
    %c0_2 = arith.constant 0 : index
    %1 = vector.load %arg2[%c0_1, %c0_2] : memref<32x32xf32, #tpu.memory_space<vmem>>, vector<32x32xf32>
    %cst = arith.constant dense<0.000000e+00> : vector<16x32xf32>
    %2 = tpu.matmul %0, %1, %cst {dimension_numbers = #tpu.dot_dimension_numbers<[1], [0], [0], [1], [0, 0, 1, 1], [], []>} : vector<16x32xf32>, vector<32x32xf32>, vector<16x32xf32> -> vector<16x32xf32>
    %c0_3 = arith.constant 0 : index
    %c0_4 = arith.constant 0 : index
    %3 = vector.load %arg3[%c0_3, %c0_4] : memref<1x32xf32, #tpu.memory_space<vmem>>, vector<1x32xf32>
    %4 = vector.broadcast %3 : vector<1x32xf32> to vector<16x32xf32>
    %5 = arith.addf %2, %4 : vector<16x32xf32>
    %cst_5 = arith.constant 0.000000e+00 : f32
    %6 = vector.broadcast %cst_5 : f32 to vector<16x32xf32>
    %7 = arith.maximumf %5, %6 : vector<16x32xf32>
    %c0_6 = arith.constant 0 : index
    %c0_7 = arith.constant 0 : index
    %8 = vector.load %arg4[%c0_6, %c0_7] : memref<32x2xf32, #tpu.memory_space<vmem>>, vector<32x2xf32>
    %cst_8 = arith.constant dense<0.000000e+00> : vector<16x2xf32>
    %9 = tpu.matmul %7, %8, %cst_8 {dimension_numbers = #tpu.dot_dimension_numbers<[1], [0], [0], [1], [0, 0, 1, 1], [], []>} : vector<16x32xf32>, vector<32x2xf32>, vector<16x2xf32> -> vector<16x2xf32>
    %c0_9 = arith.constant 0 : index
    %c0_10 = arith.constant 0 : index
    %10 = vector.load %arg5[%c0_9, %c0_10] : memref<1x2xf32, #tpu.memory_space<vmem>>, vector<1x2xf32>
    %11 = vector.broadcast %10 : vector<1x2xf32> to vector<16x2xf32>
    %12 = arith.addf %9, %11 : vector<16x2xf32>
    %cst_11 = arith.constant 0.000000e+00 : f32
    %13 = vector.broadcast %cst_11 : f32 to vector<16x2xf32>
    %14 = arith.subf %13, %12 : vector<16x2xf32>
    %15 = math.exp %14 : vector<16x2xf32>
    %cst_12 = arith.constant 1.000000e+00 : f32
    %16 = vector.broadcast %cst_12 : f32 to vector<16x2xf32>
    %17 = arith.addf %16, %15 : vector<16x2xf32>
    %18 = tpu.reciprocal %17 {approx = true} : vector<16x2xf32> -> vector<16x2xf32>
    %c0_13 = arith.constant 0 : index
    %c0_14 = arith.constant 0 : index
    %19 = vector.load %arg6[%c0_13, %c0_14] : memref<16x2xf32, #tpu.memory_space<vmem>>, vector<16x2xf32>
    tpu.vector_store %arg6[%c0_13, %c0_14], %18 {strides = array<i32>} : memref<16x2xf32, #tpu.memory_space<vmem>>, vector<16x2xf32>,
    return
  }
  func.func @transform_0(%arg0: i32) -> (i32, i32) {
    %c0_i32 = arith.constant 0 : i32
    %c0_i32_0 = arith.constant 0 : i32
    return %arg0, %c0_i32 : i32, i32
  }
  func.func @transform_1(%arg0: i32) -> (i32, i32) {
    %c0_i32 = arith.constant 0 : i32
    %c0_i32_0 = arith.constant 0 : i32
    %c0_i32_1 = arith.constant 0 : i32
    return %c0_i32, %c0_i32_0 : i32, i32
  }
  func.func @transform_2(%arg0: i32) -> (i32, i32) {
    %c0_i32 = arith.constant 0 : i32
    %c0_i32_0 = arith.constant 0 : i32
    %c0_i32_1 = arith.constant 0 : i32
    return %c0_i32, %c0_i32_0 : i32, i32
  }
  func.func @transform_3(%arg0: i32) -> (i32, i32) {
    %c0_i32 = arith.constant 0 : i32
    %c0_i32_0 = arith.constant 0 : i32
    %c0_i32_1 = arith.constant 0 : i32
    return %c0_i32, %c0_i32_0 : i32, i32
  }
  func.func @transform_4(%arg0: i32) -> (i32, i32) {
    %c0_i32 = arith.constant 0 : i32
    %c0_i32_0 = arith.constant 0 : i32
    %c0_i32_1 = arith.constant 0 : i32
    return %c0_i32, %c0_i32_0 : i32, i32
  }
  func.func @transform_5(%arg0: i32) -> (i32, i32) {
    %c0_i32 = arith.constant 0 : i32
    %c0_i32_0 = arith.constant 0 : i32
    return %arg0, %c0_i32 : i32, i32
  }
}

</mosaic_0001>

<llo_original>
// kernel: tpu_custom_call.1
$region0: #{tpu_custom_call.1}
  #allocation0 [shape = 'u32[]', space=smem, size = 0x4, offset = 0x4, fixed_abs, tag = 'smem constant byte address 0x4 - core index']
  #allocation1 [shape = 'u32[144,128]{1,0:T(1,128)}', space=vmem, size = 0x12000, scoped, tag = 'internal scratch']
  %s0 = inlined_call_operand.vmem [shape: f32[48,32], index: 0, kind: input, shape index: {}]
  %s1 = inlined_call_operand.vmem [shape: f32[32,32], index: 1, kind: input, shape index: {}]
  %s2 = inlined_call_operand.vmem [shape: f32[1,32], index: 2, kind: input, shape index: {}]
  %s3 = inlined_call_operand.vmem [shape: f32[32,2], index: 3, kind: input, shape index: {}]
  %s4 = inlined_call_operand.vmem [shape: f32[1,2], index: 4, kind: input, shape index: {}]
  %s5 = inlined_call_operand.vmem [shape: f32[48,2], index: 5, kind: output, shape index: {}]
  %s6 = sld [smem:[#allocation0]]
  $region53: #{tpu_custom_call.1} parent=0
    _
  %s8 = ssub.s32 1, %s6
  %s9 = scalar_select 0, %s8, %s6
  loop: start=0, step=1, limit=5
  $region2: #{tpu_custom_call.1} parent=0 // loop_pre_header
    _
  $region3: #{tpu_custom_call.1} parent=0 // loop_header
    %s11 = sphi 0, %s15
    %p12 = scmp.ge.s32.totalorder %s11, 5
    %s21 = sphi 0, %s23
    %s24 = sphi 0, %s21
    %s25 = sphi 0, %s24
    %s41 = sphi 0, %s25
    %s45 = sphi 0, %s45
    %s47 = sphi 0, %s45
    %s48 = sphi 0, %s47
    %s62 = sphi 0, %s48
    %s66 = sphi 0, %s66
    %s68 = sphi 0, %s66
    %s69 = sphi 0, %s68
    %s83 = sphi 0, %s69
    %s87 = sphi 0, %s87
    %s89 = sphi 0, %s87
    %s90 = sphi 0, %s89
    %s104 = sphi 0, %s90
    %s108 = sphi 0, %s108
    %s110 = sphi 0, %s108
    %s111 = sphi 0, %s110
    %s125 = sphi 0, %s111
    %s131 = sphi 0, %s133
    %s134 = sphi 0, %s131
    %s135 = sphi 0, %s134
    %s151 = sphi 0, %s135
  $region4: #{tpu_custom_call.1} parent=0 // loop_header_branch
    %14 = sbr.rel (%p12) target = $region8
  $region5: #{tpu_custom_call.1} parent=0 // loop_body
    %s16 = ssub.s32 %s11, 1
    %s17 = ssub.s32 %s11, 2
    %s18 = sadd.s32 %s11, 1
    %s19 = ssub.s32 %s11, %s18
    %p20 = scmp.eq.s32.totalorder %s19, 0
    %s22 = sadd.s32 %s21, 1
    %s23 = scalar_select %p20, %s21, %s22
    %p26 = pneg %p20
    %p27 = scmp.eq.s32.totalorder %s11, 2
    %p28 = por %p26, %p27
    %p29 = scmp.ne.s32.totalorder %s21, %s24
    %p30 = scmp.eq.s32.totalorder %s11, 0
    %p31 = por %p29, %p30
    %p32 = scmp.ne.s32.totalorder %s21, %s24
    %p33 = scmp.eq.s32.totalorder %s16, 2
    %p34 = por %p32, %p33
    %p35 = scmp.ne.s32.totalorder %s24, %s25
    %p36 = scmp.eq.s32.totalorder %s16, 0
    %p37 = por %p35, %p36
    %p38 = scmp.ne.s32.totalorder %s24, %s25
    %p39 = scmp.eq.s32.totalorder %s17, 2
    %p40 = por %p38, %p39
    %p42 = scmp.ne.s32.totalorder %s25, %s41
    %p43 = scmp.eq.s32.totalorder %s17, 0
    %p44 = por %p42, %p43
    %s46 = sadd.s32 %s45, 1
    %p49 = scmp.eq.s32.totalorder %s11, 2
    %p50 = scmp.ne.s32.totalorder %s45, %s47
    %p51 = scmp.eq.s32.totalorder %s11, 0
    %p52 = por %p50, %p51
    %p53 = scmp.ne.s32.totalorder %s45, %s47
    %p54 = scmp.eq.s32.totalorder %s16, 2
    %p55 = por %p53, %p54
    %p56 = scmp.ne.s32.totalorder %s47, %s48
    %p57 = scmp.eq.s32.totalorder %s16, 0
    %p58 = por %p56, %p57
    %p59 = scmp.ne.s32.totalorder %s47, %s48
    %p60 = scmp.eq.s32.totalorder %s17, 2
    %p61 = por %p59, %p60
    %p63 = scmp.ne.s32.totalorder %s48, %s62
    %p64 = scmp.eq.s32.totalorder %s17, 0
    %p65 = por %p63, %p64
    %s67 = sadd.s32 %s66, 1
    %p70 = scmp.eq.s32.totalorder %s11, 2
    %p71 = scmp.ne.s32.totalorder %s66, %s68
    %p72 = scmp.eq.s32.totalorder %s11, 0
    %p73 = por %p71, %p72
    %p74 = scmp.ne.s32.totalorder %s66, %s68
    %p75 = scmp.eq.s32.totalorder %s16, 2
    %p76 = por %p74, %p75
    %p77 = scmp.ne.s32.totalorder %s68, %s69
    %p78 = scmp.eq.s32.totalorder %s16, 0
    %p79 = por %p77, %p78
    %p80 = scmp.ne.s32.totalorder %s68, %s69
    %p81 = scmp.eq.s32.totalorder %s17, 2
    %p82 = por %p80, %p81
    %p84 = scmp.ne.s32.totalorder %s69, %s83
    %p85 = scmp.eq.s32.totalorder %s17, 0
    %p86 = por %p84, %p85
    %s88 = sadd.s32 %s87, 1
    %p91 = scmp.eq.s32.totalorder %s11, 2
    %p92 = scmp.ne.s32.totalorder %s87, %s89
    %p93 = scmp.eq.s32.totalorder %s11, 0
    %p94 = por %p92, %p93
    %p95 = scmp.ne.s32.totalorder %s87, %s89
    %p96 = scmp.eq.s32.totalorder %s16, 2
    %p97 = por %p95, %p96
    %p98 = scmp.ne.s32.totalorder %s89, %s90
    %p99 = scmp.eq.s32.totalorder %s16, 0
    %p100 = por %p98, %p99
    %p101 = scmp.ne.s32.totalorder %s89, %s90
    %p102 = scmp.eq.s32.totalorder %s17, 2
    %p103 = por %p101, %p102
    %p105 = scmp.ne.s32.totalorder %s90, %s104
    %p106 = scmp.eq.s32.totalorder %s17, 0
    %p107 = por %p105, %p106
    %s109 = sadd.s32 %s108, 1
    %p112 = scmp.eq.s32.totalorder %s11, 2
    %p113 = scmp.ne.s32.totalorder %s108, %s110
    %p114 = scmp.eq.s32.totalorder %s11, 0
    %p115 = por %p113, %p114
    %p116 = scmp.ne.s32.totalorder %s108, %s110
    %p117 = scmp.eq.s32.totalorder %s16, 2
    %p118 = por %p116, %p117
    %p119 = scmp.ne.s32.totalorder %s110, %s111
    %p120 = scmp.eq.s32.totalorder %s16, 0
    %p121 = por %p119, %p120
    %p122 = scmp.ne.s32.totalorder %s110, %s111
    %p123 = scmp.eq.s32.totalorder %s17, 2
    %p124 = por %p122, %p123
    %p126 = scmp.ne.s32.totalorder %s111, %s125
    %p127 = scmp.eq.s32.totalorder %s17, 0
    %p128 = por %p126, %p127
    %s129 = ssub.s32 %s11, %s18
    %p130 = scmp.eq.s32.totalorder %s129, 0
    %s132 = sadd.s32 %s131, 1
    %s133 = scalar_select %p130, %s131, %s132
    %p136 = pneg %p130
    %p137 = scmp.eq.s32.totalorder %s11, 2
    %p138 = por %p136, %p137
    %p139 = scmp.ne.s32.totalorder %s131, %s134
    %p140 = scmp.eq.s32.totalorder %s11, 0
    %p141 = por %p139, %p140
    %p142 = scmp.ne.s32.totalorder %s131, %s134
    %p143 = scmp.eq.s32.totalorder %s16, 2
    %p144 = por %p142, %p143
    %p145 = scmp.ne.s32.totalorder %s134, %s135
    %p146 = scmp.eq.s32.totalorder %s16, 0
    %p147 = por %p145, %p146
    %p148 = scmp.ne.s32.totalorder %s134, %s135
    %p149 = scmp.eq.s32.totalorder %s17, 2
    %p150 = por %p148, %p149
    %p152 = scmp.ne.s32.totalorder %s135, %s151
    %p153 = scmp.eq.s32.totalorder %s17, 0
    %p154 = por %p152, %p153
    %p155 = scmp.le.s32.totalorder 1, %s11
    %p156 = scmp.lt.s32.totalorder %s11, 4
    %p157 = pnand %p155, %p156
    %p158 = pneg %p157
    // Predicated region
    $region9: #{tpu_custom_call.1} parent=5 // pred_check
      _
    $region10: #{tpu_custom_call.1} parent=5 // pred_check_branch
      %160 = sbr.rel (%p157) target = $region12
    $region11: #{tpu_custom_call.1} parent=5 // pred_region
      %s161 = ssub.s32 %s11, 1
      // Predicated region
      $region13: #{tpu_custom_call.1} parent=11 // pred_check
        %p162 = pneg %p58
      $region14: #{tpu_custom_call.1} parent=11 // pred_check_branch
        %164 = sbr.rel (%p162) target = $region16
      $region15: #{tpu_custom_call.1} parent=11 // pred_region
        _
      $region16: #{tpu_custom_call.1} parent=11 // pred_fallthru
        _
      // Predicated region
      $region17: #{tpu_custom_call.1} parent=11 // pred_check
        %p165 = pneg %p79
      $region18: #{tpu_custom_call.1} parent=11 // pred_check_branch
        %167 = sbr.rel (%p165) target = $region20
      $region19: #{tpu_custom_call.1} parent=11 // pred_region
        _
      $region20: #{tpu_custom_call.1} parent=11 // pred_fallthru
        _
      // Predicated region
      $region21: #{tpu_custom_call.1} parent=11 // pred_check
        %p168 = pneg %p100
      $region22: #{tpu_custom_call.1} parent=11 // pred_check_branch
        %170 = sbr.rel (%p168) target = $region24
      $region23: #{tpu_custom_call.1} parent=11 // pred_region
        _
      $region24: #{tpu_custom_call.1} parent=11 // pred_fallthru
        _
      // Predicated region
      $region25: #{tpu_custom_call.1} parent=11 // pred_check
        %p171 = pneg %p121
      $region26: #{tpu_custom_call.1} parent=11 // pred_check_branch
        %173 = sbr.rel (%p171) target = $region28
      $region27: #{tpu_custom_call.1} parent=11 // pred_region
        _
      $region28: #{tpu_custom_call.1} parent=11 // pred_fallthru
        _
    $region12: #{tpu_custom_call.1} parent=5 // pred_fallthru
      _
    %p174 = scmp.lt.s32.totalorder %s11, 3
    // Predicated region
    $region29: #{tpu_custom_call.1} parent=5 // pred_check
      %p175 = pneg %p174
    $region30: #{tpu_custom_call.1} parent=5 // pred_check_branch
      %177 = sbr.rel (%p175) target = $region32
    $region31: #{tpu_custom_call.1} parent=5 // pred_region
      // Predicated region
      $region33: #{tpu_custom_call.1} parent=31 // pred_check
        %p178 = pneg %p31
      $region34: #{tpu_custom_call.1} parent=31 // pred_check_branch
        %180 = sbr.rel (%p178) target = $region36
      $region35: #{tpu_custom_call.1} parent=31 // pred_region
        %s181 = smul.u32 2, %s11
        %p182 = scmp.lt.s32.totalorder %s181, 5
        %s183 = scalar_select %p182, %s181, 5
        %s184 = smul.addr %s183, 8
        %s185 = scalar_lea.vmem %s0, %s184
        %s186 = smul.u32 2, %s11
      $region36: #{tpu_custom_call.1} parent=31 // pred_fallthru
        _
    $region32: #{tpu_custom_call.1} parent=5 // pred_fallthru
      _
    %p187 = scmp.le.s32.totalorder 1, %s11
    %p188 = scmp.lt.s32.totalorder %s11, 4
    %p189 = pnand %p187, %p188
    %p190 = pneg %p189
    // Predicated region
    $region37: #{tpu_custom_call.1} parent=5 // pred_check
      _
    $region38: #{tpu_custom_call.1} parent=5 // pred_check_branch
      %192 = sbr.rel (%p189) target = $region40
    $region39: #{tpu_custom_call.1} parent=5 // pred_region
      %s193 = ssub.s32 %s11, 1
      %s194 = smul.u32 2, %s16
      %p195 = scmp.lt.s32.totalorder %s194, 5
      %s196 = scalar_select %p195, %s194, 5
      %s197 = smul.addr %s196, 8
      %s198 = scalar_lea.vmem %s0, %s197
      %p199 = pneg %p37
      %p200 = pneg %p34
      %p201 = pneg %p58
      %p202 = pneg %p55
      %p203 = pneg %p79
      %p204 = pneg %p76
      %p205 = pneg %p100
      %p206 = pneg %p97
      %p207 = pneg %p121
      %p208 = pneg %p118
      %p209 = pneg %p147
      %p210 = pneg %p144
      %s211 = smul.u32 2, %s16
      %p212 = scmp.lt.s32.totalorder %s211, 5
      %s213 = scalar_select %p212, %s211, 5
      %s214 = smul.addr %s213, 8
      %s215 = scalar_lea.vmem %s5, %s214
      %s216 = smul.u32 2, %s16
      %p217 = scmp.lt.s32.totalorder %s216, 5
      %s218 = scalar_select %p217, %s216, 5
      %s219 = smul.addr %s218, 8
      %s220 = scalar_lea.vmem %s0, %s219
      %s221 = smul.u32 2, %s16
      %s222 = smul.u32 2, %s16
      %p223 = scmp.lt.s32.totalorder %s222, 5
      %s224 = scalar_select %p223, %s222, 5
      %s225 = smul.addr %s224, 8
      %s226 = scalar_lea.vmem %s5, %s225
      %s227 = smul.u32 2, %s16
      %v228 = vld [vmem:[%s220] sm:$0xff]
      %v229 = vld [vmem:[%s220 + $0x8] sm:$0xff]
      %v230 = vld [vmem:[%s1] sm:$0xff]
      %v231 = vld [vmem:[%s1 + $0x8] sm:$0xff]
      %v232 = vld [vmem:[%s1 + $0x10] sm:$0xff]
      %v233 = vld [vmem:[%s1 + $0x18] sm:$0xff]
      %v234 = vld [vmem:[%s2] sm:$0x1]
      %v236 = vlaneseq
      %v237 = vshrl.u32 %v236, 7
      %v238 = vsub.s32 0, %v237
      %v239 = vrot.slane %v234, %v238
      %vm241 = vcmask 261120
      %v243 = vsel %vm241, %v228, 0
      %v246 = vsel %vm241, %v229, 0
      %248 = vmatprep.subr.mxu0 0.0
      %249 = vmatpush1.msra.mxu0 %v230
      %250 = vmatprep.subr.mxu0 0.0
      %251 = vmatpush1.msra.mxu0 %v231
      %252 = vmatprep.subr.mxu0 0.0
      %253 = vmatpush1.msra.mxu0 %v232
      %254 = vmatprep.subr.mxu0 0.0
      %255 = vmatpush1.msra.mxu0 %v233
      %256 = vmatprep.subr.mxu0 0.0
      %257 = vmatpush1.msra.mxu0 0.0
      %258 = vmatprep.subr.mxu0 0.0
      %259 = vmatpush1.msra.mxu0 0.0
      %260 = vmatprep.subr.mxu0 0.0
      %261 = vmatpush1.msra.mxu0 0.0
      %262 = vmatprep.subr.mxu0 0.0
      %263 = vmatpush1.msra.mxu0 0.0
      %264 = vmatprep.subr.mxu0 0.0
      %265 = vmatpush1.msra.mxu0 0.0
      %266 = vmatprep.subr.mxu0 0.0
      %267 = vmatpush1.msra.mxu0 0.0
      %268 = vmatprep.subr.mxu0 0.0
      %269 = vmatpush1.msra.mxu0 0.0
      %270 = vmatprep.subr.mxu0 0.0
      %271 = vmatpush1.msra.mxu0 0.0
      %272 = vmatprep.subr.mxu0 0.0
      %273 = vmatpush1.msra.mxu0 0.0
      %274 = vmatprep.subr.mxu0 0.0
      %275 = vmatpush1.msra.mxu0 0.0
      %276 = vmatprep.subr.mxu0 0.0
      %277 = vmatpush1.msra.mxu0 0.0
      %278 = vmatprep.subr.mxu0 0.0
      %279 = vmatpush1.msra.mxu0 0.0
      %280 = vmatprep.subr.mxu0 0.0
      %281 = vmatpush1.msra.mxu0 0.0
      %282 = vmatprep.subr.mxu0 0.0
      %283 = vmatpush1.msra.mxu0 0.0
      %284 = vmatprep.subr.mxu0 0.0
      %285 = vmatpush1.msra.mxu0 0.0
      %286 = vmatprep.subr.mxu0 0.0
      %287 = vmatpush1.msra.mxu0 0.0
      %288 = vmatprep.subr.mxu0 0.0
      %289 = vmatpush1.msra.mxu0 0.0
      %290 = vmatprep.subr.mxu0 0.0
      %291 = vmatpush1.msra.mxu0 0.0
      %292 = vmatprep.subr.mxu0 0.0
      %293 = vmatpush1.msra.mxu0 0.0
      %294 = vmatprep.subr.mxu0 0.0
      %295 = vmatpush1.msra.mxu0 0.0
      %296 = vmatprep.subr.mxu0 0.0
      %297 = vmatpush1.msra.mxu0 0.0
      %298 = vmatprep.subr.mxu0 0.0
      %299 = vmatpush1.msra.mxu0 0.0
      %300 = vmatprep.subr.mxu0 0.0
      %301 = vmatpush1.msra.mxu0 0.0
      %302 = vmatprep.subr.mxu0 0.0
      %303 = vmatpush1.msra.mxu0 0.0
      %304 = vmatprep.subr.mxu0 0.0
      %305 = vmatpush1.msra.mxu0 0.0
      %306 = vmatprep.subr.mxu0 0.0
      %307 = vmatpush1.msra.mxu0 0.0
      %308 = vmatprep.subr.mxu0 0.0
      %309 = vmatpush1.msra.mxu0 0.0
      %310 = vmatprep.subr.mxu0 0.0
      %311 = vmatpush1.msra.mxu0 0.0
      %312 = vmatprep.mubr.f32.mxu0 0.0
      %313 = vmatmul.mubr.f32.gmra.mrb[0].mxu0 %v243
      %v314 = vpop.f32.mrb[0].mxu0
      %v315 = vadd.f32 %v239, %v314
      %v316 = vpop.f32.mrb[0].mxu0
      %317 = vmatprep.mubr.f32.mxu0 0.0
      %318 = vmatmul.mubr.f32.gmra.mrb[0].mxu0 %v246
      %v319 = vpop.f32.mrb[0].mxu0
      %v320 = vadd.f32 %v239, %v319
      %v321 = vpop.f32.mrb[0].mxu0
      %322 = vdwg.mxu0
      %v323 = vmax.f32 %v315, 0.0
      %v324 = vmax.f32 %v320, 0.0
      %v325 = vld [vmem:[%s3] sm:$0xff]
      %v326 = vld [vmem:[%s3 + $0x8] sm:$0xff]
      %v327 = vld [vmem:[%s3 + $0x10] sm:$0xff]
      %v328 = vld [vmem:[%s3 + $0x18] sm:$0xff]
      %v329 = vld [vmem:[%s4] sm:$0x1]
      %v331 = vlaneseq
      %v332 = vshrl.u32 %v331, 7
      %v333 = vsub.s32 0, %v332
      %v334 = vrot.slane %v329, %v333
      %v337 = vsel %vm241, %v323, 0
      %v340 = vsel %vm241, %v324, 0
      %342 = vmatprep.subr.mxu0 0.0
      %343 = vmatpush1.msra.mxu0 %v325
      %344 = vmatprep.subr.mxu0 0.0
      %345 = vmatpush1.msra.mxu0 %v326
      %346 = vmatprep.subr.mxu0 0.0
      %347 = vmatpush1.msra.mxu0 %v327
      %348 = vmatprep.subr.mxu0 0.0
      %349 = vmatpush1.msra.mxu0 %v328
      %350 = vmatprep.subr.mxu0 0.0
      %351 = vmatpush1.msra.mxu0 0.0
      %352 = vmatprep.subr.mxu0 0.0
      %353 = vmatpush1.msra.mxu0 0.0
      %354 = vmatprep.subr.mxu0 0.0
      %355 = vmatpush1.msra.mxu0 0.0
      %356 = vmatprep.subr.mxu0 0.0
      %357 = vmatpush1.msra.mxu0 0.0
      %358 = vmatprep.subr.mxu0 0.0
      %359 = vmatpush1.msra.mxu0 0.0
      %360 = vmatprep.subr.mxu0 0.0
      %361 = vmatpush1.msra.mxu0 0.0
      %362 = vmatprep.subr.mxu0 0.0
      %363 = vmatpush1.msra.mxu0 0.0
      %364 = vmatprep.subr.mxu0 0.0
      %365 = vmatpush1.msra.mxu0 0.0
      %366 = vmatprep.subr.mxu0 0.0
      %367 = vmatpush1.msra.mxu0 0.0
      %368 = vmatprep.subr.mxu0 0.0
      %369 = vmatpush1.msra.mxu0 0.0
      %370 = vmatprep.subr.mxu0 0.0
      %371 = vmatpush1.msra.mxu0 0.0
      %372 = vmatprep.subr.mxu0 0.0
      %373 = vmatpush1.msra.mxu0 0.0
      %374 = vmatprep.subr.mxu0 0.0
      %375 = vmatpush1.msra.mxu0 0.0
      %376 = vmatprep.subr.mxu0 0.0
      %377 = vmatpush1.msra.mxu0 0.0
      %378 = vmatprep.subr.mxu0 0.0
      %379 = vmatpush1.msra.mxu0 0.0
      %380 = vmatprep.subr.mxu0 0.0
      %381 = vmatpush1.msra.mxu0 0.0
      %382 = vmatprep.subr.mxu0 0.0
      %383 = vmatpush1.msra.mxu0 0.0
      %384 = vmatprep.subr.mxu0 0.0
      %385 = vmatpush1.msra.mxu0 0.0
      %386 = vmatprep.subr.mxu0 0.0
      %387 = vmatpush1.msra.mxu0 0.0
      %388 = vmatprep.subr.mxu0 0.0
      %389 = vmatpush1.msra.mxu0 0.0
      %390 = vmatprep.subr.mxu0 0.0
      %391 = vmatpush1.msra.mxu0 0.0
      %392 = vmatprep.subr.mxu0 0.0
      %393 = vmatpush1.msra.mxu0 0.0
      %394 = vmatprep.subr.mxu0 0.0
      %395 = vmatpush1.msra.mxu0 0.0
      %396 = vmatprep.subr.mxu0 0.0
      %397 = vmatpush1.msra.mxu0 0.0
      %398 = vmatprep.subr.mxu0 0.0
      %399 = vmatpush1.msra.mxu0 0.0
      %400 = vmatprep.subr.mxu0 0.0
      %401 = vmatpush1.msra.mxu0 0.0
      %402 = vmatprep.subr.mxu0 0.0
      %403 = vmatpush1.msra.mxu0 0.0
      %404 = vmatprep.subr.mxu0 0.0
      %405 = vmatpush1.msra.mxu0 0.0
      %406 = vmatprep.mubr.f32.mxu0 0.0
      %407 = vmatmul.mubr.f32.gmra.mrb[0].mxu0 %v337
      %v408 = vpop.f32.mrb[0].mxu0
      %v409 = vadd.f32 %v334, %v408
      %v410 = vpop.f32.mrb[0].mxu0
      %411 = vmatprep.mubr.f32.mxu0 0.0
      %412 = vmatmul.mubr.f32.gmra.mrb[0].mxu0 %v340
      %v413 = vpop.f32.mrb[0].mxu0
      %v414 = vadd.f32 %v334, %v413
      %v415 = vpop.f32.mrb[0].mxu0
      %416 = vdwg.mxu0
      %v417 = vsub.f32 0.0, %v409
      %v418 = vsub.f32 0.0, %v414
      %v419 = vmul.f32 %v417, 1.442695
      %v420 = vpow.pop %v419
      %v421 = vmul.f32 %v418, 1.442695
      %v422 = vpow.pop %v421
      %v423 = vadd.f32 %v420, 1.0
      %v424 = vadd.f32 %v422, 1.0
      %v425 = vrcp.pop %v423
      %v426 = vrcp.pop %v424
      %vm427 = vcmask 15360
      %428 = vst.msk [vmem:[%s226] sm:$0xff] %vm427, %v425
      %429 = vst.msk [vmem:[%s226 + $0x8] sm:$0xff] %vm427, %v426
      %s430 = smul.u32 2, %s16
      %p431 = scmp.lt.s32.totalorder %s430, 5
      %s432 = scalar_select %p431, %s430, 5
      %s433 = smul.addr %s432, 8
      %s434 = scalar_lea.vmem %s5, %s433
      // Predicated region
      $region41: #{tpu_custom_call.1} parent=39 // pred_check
        %p435 = pneg %p144
      $region42: #{tpu_custom_call.1} parent=39 // pred_check_branch
        %437 = sbr.rel (%p435) target = $region44
      $region43: #{tpu_custom_call.1} parent=39 // pred_region
        %s438 = smul.u32 2, %s16
      $region44: #{tpu_custom_call.1} parent=39 // pred_fallthru
        _
    $region40: #{tpu_custom_call.1} parent=5 // pred_fallthru
      _
    %p439 = scmp.le.s32.totalorder 2, %s11
    // Predicated region
    $region45: #{tpu_custom_call.1} parent=5 // pred_check
      %p440 = pneg %p439
    $region46: #{tpu_custom_call.1} parent=5 // pred_check_branch
      %442 = sbr.rel (%p440) target = $region48
    $region47: #{tpu_custom_call.1} parent=5 // pred_region
      %s443 = ssub.s32 %s11, 2
      // Predicated region
      $region49: #{tpu_custom_call.1} parent=47 // pred_check
        %p444 = pneg %p150
      $region50: #{tpu_custom_call.1} parent=47 // pred_check_branch
        %446 = sbr.rel (%p444) target = $region52
      $region51: #{tpu_custom_call.1} parent=47 // pred_region
        %s447 = smul.u32 2, %s17
        %p448 = scmp.lt.s32.totalorder %s447, 5
        %s449 = scalar_select %p448, %s447, 5
        %s450 = smul.addr %s449, 8
        %s451 = scalar_lea.vmem %s5, %s450
      $region52: #{tpu_custom_call.1} parent=47 // pred_fallthru
        _
    $region48: #{tpu_custom_call.1} parent=5 // pred_fallthru
      _
  $region6: #{tpu_custom_call.1} parent=0 // loop_footer
    %s15 = sadd.s32 1, %s11
  $region7: #{tpu_custom_call.1} parent=0 // loop_footer_branch
    %10 = sbr.rel target = $region3
  $region8: #{tpu_custom_call.1} parent=0 // loop_exit
    _

</llo_original>
